<compile_context>
chip_gen: v5e
topology: v5e:2x2
jax: 0.10.0
libtpu: 0.0.40
codegen_flags: <defaults>
</compile_context>

<pallas_src>
import numpy as np
import jax
import jax.numpy as jnp
from jax.experimental import pallas as pl
from jax.experimental.pallas import tpu as pltpu

_EPS = 1e-5


def _resblock_kernel(x_ref, b1_ref, b2_ref, sup_ref, sdn_ref, fold_ref,
                     g1_ref, be1_ref, g2_ref, be2_ref, out_ref):
    x = x_ref[...].astype(jnp.float32)          # (R, L) lane-folded activations
    sup = sup_ref[...]                          # (R, R): pulls row h-1 (0 at image top)
    sdn = sdn_ref[...]                          # (R, R): pulls row h+1 (0 at image bottom)
    fold = fold_ref[...]                        # (L, L): per-channel fold, scaled by 1/M

    def conv3x3(y, b_ref):
        # vertical taps via shift matmuls (encode vertical zero padding)
        up = jnp.dot(sup, y, preferred_element_type=jnp.float32)
        dn = jnp.dot(sdn, y, preferred_element_type=jnp.float32)
        # single im2col-style dot: K = 3*W*C; horizontal taps + padding are folded
        # into the banded weight matrix.
        patch = jnp.concatenate([up, y, dn], axis=1)                  # (R, 3L)
        return jnp.dot(patch, b_ref[...], preferred_element_type=jnp.float32)

    def batchnorm(y, g, b):
        # training-mode BN: biased batch stats over all N*H*W positions per channel.
        # fold dot returns the per-channel mean/var already tiled to the (1, L) layout.
        mean = jnp.sum(jnp.dot(y, fold, preferred_element_type=jnp.float32),
                       axis=0, keepdims=True)                         # (1, L)
        yc = y - mean
        var = jnp.sum(jnp.dot(yc * yc, fold, preferred_element_type=jnp.float32),
                      axis=0, keepdims=True)                          # (1, L), biased
        return yc * jax.lax.rsqrt(var + _EPS) * g + b

    y = conv3x3(x, b1_ref)
    y = jnp.maximum(batchnorm(y, g1_ref[...], be1_ref[...]), 0.0)
    y = conv3x3(y, b2_ref)
    y = batchnorm(y, g2_ref[...], be2_ref[...])
    # residual add + relu; lane-dense (R, L) store.
    out_ref[...] = jnp.maximum(y + x, 0.0).astype(out_ref.dtype)


# ----------------------------- wrapper-side weight prep (glue) -----------------------------

def _banded_conv_weight(w_oihw, W):
    """torch (Cout, Cin, 3, 3) -> (3*W*Cin, W*Cout) banded matrix: folds the horizontal
    taps (dx) and horizontal zero padding into the contraction dimension."""
    wt = np.transpose(np.asarray(w_oihw, dtype=np.float32), (2, 3, 1, 0))  # (dy, dx, Cin, Cout)
    cin, cout = wt.shape[2], wt.shape[3]
    B = np.zeros((3, W, cin, W, cout), np.float32)
    for dy in range(3):
        for dx in range(3):
            for w_out in range(W):
                w_in = w_out + dx - 1
                if 0 <= w_in < W:
                    B[dy, w_in, :, w_out, :] = wt[dy, dx]
    return B.reshape(3 * W * cin, W * cout)


def _row_shift_matrix(N, H, offset):
    """(N*H, N*H) matrix S with (S @ y)[r] = y[r + offset] when the shifted row stays
    inside the same image, else 0 (vertical zero padding of the 3x3 conv)."""
    R = N * H
    S = np.zeros((R, R), np.float32)
    r = np.arange(R)
    h = r % H
    valid = (h + offset >= 0) & (h + offset < H)
    S[r[valid], r[valid] + offset] = 1.0
    return S


def residual_block(x_nchw, w1_oihw, g1, b1, w2_oihw, g2, b2):
    """ResidualBlock.forward for dim=2, stride=1, downsample=None.  NCHW in / NCHW out."""
    N, C, H, W = x_nchw.shape
    R, L, M = N * H, W * C, N * H * W

    # --- glue: layout conversion + constant-matrix construction (tiny, host-side) ---
    x2d = jnp.transpose(x_nchw, (0, 2, 3, 1)).reshape(R, L)          # lane-folded (N*H, W*C)
    B1 = jnp.asarray(_banded_conv_weight(w1_oihw, W))                # (3L, L)
    B2 = jnp.asarray(_banded_conv_weight(w2_oihw, W))                # (3L, L)
    Sup = jnp.asarray(_row_shift_matrix(N, H, -1))                   # (R, R)
    Sdn = jnp.asarray(_row_shift_matrix(N, H, +1))                   # (R, R)
    fold = jnp.asarray(np.kron(np.ones((W, W), np.float32),
                               np.eye(C, dtype=np.float32)) / float(M))  # (L, L)

    def tile_c(v):
        return jnp.tile(jnp.asarray(v, jnp.float32).reshape(1, C), (1, W))   # (1, L)

    g1_L, b1_L, g2_L, b2_L = tile_c(g1), tile_c(b1), tile_c(g2), tile_c(b2)

    def full(shape):
        return pl.BlockSpec(shape, lambda i, z=(0,) * len(shape): z)

    # advisory cost estimate (two big conv dots + shift dots + fold dots + elementwise)
    flops = (2 * (2 * R * (3 * L) * L)            # two conv dots, K = 3L
             + 2 * (2 * 2 * R * R * L)            # four (R,R)x(R,L) shift dots
             + 4 * (2 * R * L * L)                # four fold dots
             + 14 * R * L)                        # BN / relu / residual elementwise
    bytes_accessed = 4 * (2 * R * L + 2 * 3 * L * L + L * L + 2 * R * R + 4 * L)

    live_f32 = (2 * R * 3 * L + 6 * R * L        # patch buffers + intermediates
                + 2 * 3 * L * L + L * L + 2 * R * R)  # weights / fold / shifts
    vmem_limit = int(min(64 * 1024 * 1024, max(8 * 1024 * 1024, 4 * 4 * live_f32)))

    out2d = pl.pallas_call(
        _resblock_kernel,
        out_shape=jax.ShapeDtypeStruct((R, L), x_nchw.dtype),
        grid=(1,),
        in_specs=[
            full((R, L)),                    # x (lane-folded, also the residual)
            full((3 * L, L)),                # banded conv1 weight
            full((3 * L, L)),                # banded conv2 weight
            full((R, R)), full((R, R)),      # row-shift matrices
            full((L, L)),                    # per-channel fold matrix
            full((1, L)), full((1, L)),      # gamma1, beta1 (pre-tiled to lane layout)
            full((1, L)), full((1, L)),      # gamma2, beta2
        ],
        out_specs=full((R, L)),
        compiler_params=pltpu.CompilerParams(
            dimension_semantics=("arbitrary",),
            vmem_limit_bytes=vmem_limit),
        cost_estimate=pl.CostEstimate(flops=flops, transcendentals=2 * L,
                                      bytes_accessed=bytes_accessed),
    )(x2d, B1, B2, Sup, Sdn, fold, g1_L, b1_L, g2_L, b2_L)

    return jnp.transpose(out2d.reshape(N, H, W, C), (0, 3, 1, 2))


# --- pure-JAX reference (for correctness check only) ---
def _ref_forward(x, w1, g1, b1, w2, g2, b2):
    def conv(x, w):
        return jax.lax.conv_general_dilated(
            x, w, window_strides=(1, 1), padding=((1, 1), (1, 1)),
            dimension_numbers=("NCHW", "OIHW", "NCHW"))

    def bn(y, g, b):
        mean = jnp.mean(y, axis=(0, 2, 3), keepdims=True)
        var = jnp.mean((y - mean) ** 2, axis=(0, 2, 3), keepdims=True)
        yhat = (y - mean) * jax.lax.rsqrt(var + _EPS)
        return yhat * g.reshape(1, -1, 1, 1) + b.reshape(1, -1, 1, 1)

    out = jnp.maximum(bn(conv(x, w1), g1, b1), 0.0)
    out = bn(conv(out, w2), g2, b2)
    return jnp.maximum(out + x, 0.0)


if __name__ == "__main__":
    N, C, H, W = 2, 8, 16, 16   # in_channels == out_channels (downsample=None); W*C = 128

    key = jax.random.PRNGKey(0)
    k = jax.random.split(key, 7)
    x = jax.random.normal(k[0], (N, C, H, W), jnp.float32)
    w1 = 0.2 * jax.random.normal(k[1], (C, C, 3, 3), jnp.float32)   # torch OIHW
    w2 = 0.2 * jax.random.normal(k[2], (C, C, 3, 3), jnp.float32)
    g1 = 1.0 + 0.1 * jax.random.normal(k[3], (C,), jnp.float32)
    b1 = 0.1 * jax.random.normal(k[4], (C,), jnp.float32)
    g2 = 1.0 + 0.1 * jax.random.normal(k[5], (C,), jnp.float32)
    b2 = 0.1 * jax.random.normal(k[6], (C,), jnp.float32)

    out = jax.block_until_ready(residual_block(x, w1, g1, b1, w2, g2, b2))
    ref = jax.block_until_ready(_ref_forward(x, w1, g1, b1, w2, g2, b2))
    np.testing.assert_allclose(np.asarray(out), np.asarray(ref), rtol=1e-4, atol=1e-4)
    print("KERNEL_OK")
</pallas_src>

<mosaic_0001>
module attributes {stable_mosaic.version = 11 : i64} {
  func.func @_resblock_kernel(%arg0: i32, %arg1: memref<32x128xf32, #tpu.memory_space<vmem>>, %arg2: memref<384x128xf32, #tpu.memory_space<vmem>>, %arg3: memref<384x128xf32, #tpu.memory_space<vmem>>, %arg4: memref<32x32xf32, #tpu.memory_space<vmem>>, %arg5: memref<32x32xf32, #tpu.memory_space<vmem>>, %arg6: memref<128x128xf32, #tpu.memory_space<vmem>>, %arg7: memref<1x128xf32, #tpu.memory_space<vmem>>, %arg8: memref<1x128xf32, #tpu.memory_space<vmem>>, %arg9: memref<1x128xf32, #tpu.memory_space<vmem>>, %arg10: memref<1x128xf32, #tpu.memory_space<vmem>>, %arg11: memref<32x128xf32, #tpu.memory_space<vmem>>) attributes {dimension_semantics = [#tpu.dimension_semantics<arbitrary>], iteration_bounds = array<i64: 1>, scalar_prefetch = 0 : i64, scratch_operands = 0 : i64, tpu.core_type = #tpu.core_type<tc>, window_params = [{pipeline_mode = #tpu.pipeline_mode<synchronous>, transform_indices = @transform_0, window_bounds = array<i64: 32, 128>}, {pipeline_mode = #tpu.pipeline_mode<synchronous>, transform_indices = @transform_1, window_bounds = array<i64: 384, 128>}, {pipeline_mode = #tpu.pipeline_mode<synchronous>, transform_indices = @transform_2, window_bounds = array<i64: 384, 128>}, {pipeline_mode = #tpu.pipeline_mode<synchronous>, transform_indices = @transform_3, window_bounds = array<i64: 32, 32>}, {pipeline_mode = #tpu.pipeline_mode<synchronous>, transform_indices = @transform_4, window_bounds = array<i64: 32, 32>}, {pipeline_mode = #tpu.pipeline_mode<synchronous>, transform_indices = @transform_5, window_bounds = array<i64: 128, 128>}, {pipeline_mode = #tpu.pipeline_mode<synchronous>, transform_indices = @transform_6, window_bounds = array<i64: 1, 128>}, {pipeline_mode = #tpu.pipeline_mode<synchronous>, transform_indices = @transform_7, window_bounds = array<i64: 1, 128>}, {pipeline_mode = #tpu.pipeline_mode<synchronous>, transform_indices = @transform_8, window_bounds = array<i64: 1, 128>}, {pipeline_mode = #tpu.pipeline_mode<synchronous>, transform_indices = @transform_9, window_bounds = array<i64: 1, 128>}, {pipeline_mode = #tpu.pipeline_mode<synchronous>, transform_indices = @transform_10, window_bounds = array<i64: 32, 128>}]} {
    %c0 = arith.constant 0 : index
    %c0_0 = arith.constant 0 : index
    %0 = vector.load %arg1[%c0, %c0_0] : memref<32x128xf32, #tpu.memory_space<vmem>>, vector<32x128xf32>
    %c0_1 = arith.constant 0 : index
    %c0_2 = arith.constant 0 : index
    %1 = vector.load %arg4[%c0_1, %c0_2] : memref<32x32xf32, #tpu.memory_space<vmem>>, vector<32x32xf32>
    %c0_3 = arith.constant 0 : index
    %c0_4 = arith.constant 0 : index
    %2 = vector.load %arg5[%c0_3, %c0_4] : memref<32x32xf32, #tpu.memory_space<vmem>>, vector<32x32xf32>
    %c0_5 = arith.constant 0 : index
    %c0_6 = arith.constant 0 : index
    %3 = vector.load %arg6[%c0_5, %c0_6] : memref<128x128xf32, #tpu.memory_space<vmem>>, vector<128x128xf32>
    %cst = arith.constant dense<0.000000e+00> : vector<32x128xf32>
    %4 = tpu.matmul %1, %0, %cst {dimension_numbers = #tpu.dot_dimension_numbers<[1], [0], [0], [1], [0, 0, 1, 1], [], []>} : vector<32x32xf32>, vector<32x128xf32>, vector<32x128xf32> -> vector<32x128xf32>
    %cst_7 = arith.constant dense<0.000000e+00> : vector<32x128xf32>
    %5 = tpu.matmul %2, %0, %cst_7 {dimension_numbers = #tpu.dot_dimension_numbers<[1], [0], [0], [1], [0, 0, 1, 1], [], []>} : vector<32x32xf32>, vector<32x128xf32>, vector<32x128xf32> -> vector<32x128xf32>
    %6 = tpu.concatenate %4, %0, %5 in 1 : vector<32x128xf32>, vector<32x128xf32>, vector<32x128xf32> -> vector<32x384xf32>
    %c0_8 = arith.constant 0 : index
    %c0_9 = arith.constant 0 : index
    %7 = vector.load %arg2[%c0_8, %c0_9] : memref<384x128xf32, #tpu.memory_space<vmem>>, vector<384x128xf32>
    %cst_10 = arith.constant dense<0.000000e+00> : vector<32x128xf32>
    %8 = tpu.matmul %6, %7, %cst_10 {dimension_numbers = #tpu.dot_dimension_numbers<[1], [0], [0], [1], [0, 0, 1, 1], [], []>} : vector<32x384xf32>, vector<384x128xf32>, vector<32x128xf32> -> vector<32x128xf32>
    %c0_11 = arith.constant 0 : index
    %c0_12 = arith.constant 0 : index
    %9 = vector.load %arg7[%c0_11, %c0_12] : memref<1x128xf32, #tpu.memory_space<vmem>>, vector<1x128xf32>
    %c0_13 = arith.constant 0 : index
    %c0_14 = arith.constant 0 : index
    %10 = vector.load %arg8[%c0_13, %c0_14] : memref<1x128xf32, #tpu.memory_space<vmem>>, vector<1x128xf32>
    %cst_15 = arith.constant dense<0.000000e+00> : vector<32x128xf32>
    %11 = tpu.matmul %8, %3, %cst_15 {dimension_numbers = #tpu.dot_dimension_numbers<[1], [0], [0], [1], [0, 0, 1, 1], [], []>} : vector<32x128xf32>, vector<128x128xf32>, vector<32x128xf32> -> vector<32x128xf32>
    %cst_16 = arith.constant dense<0.000000e+00> : vector<128xf32>
    %12 = vector.multi_reduction <add>, %11, %cst_16 [0] : vector<32x128xf32> to vector<128xf32>
    %13 = vector.shape_cast %12 : vector<128xf32> to vector<1x128xf32>
    %14 = vector.broadcast %13 : vector<1x128xf32> to vector<32x128xf32>
    %15 = arith.subf %8, %14 : vector<32x128xf32>
    %16 = arith.mulf %15, %15 : vector<32x128xf32>
    %cst_17 = arith.constant dense<0.000000e+00> : vector<32x128xf32>
    %17 = tpu.matmul %16, %3, %cst_17 {dimension_numbers = #tpu.dot_dimension_numbers<[1], [0], [0], [1], [0, 0, 1, 1], [], []>} : vector<32x128xf32>, vector<128x128xf32>, vector<32x128xf32> -> vector<32x128xf32>
    %cst_18 = arith.constant dense<0.000000e+00> : vector<128xf32>
    %18 = vector.multi_reduction <add>, %17, %cst_18 [0] : vector<32x128xf32> to vector<128xf32>
    %19 = vector.shape_cast %18 : vector<128xf32> to vector<1x128xf32>
    %cst_19 = arith.constant 9.99999974E-6 : f32
    %20 = vector.broadcast %cst_19 : f32 to vector<1x128xf32>
    %21 = arith.addf %19, %20 : vector<1x128xf32>
    %22 = math.rsqrt %21 : vector<1x128xf32>
    %23 = vector.broadcast %22 : vector<1x128xf32> to vector<32x128xf32>
    %24 = arith.mulf %15, %23 : vector<32x128xf32>
    %25 = vector.broadcast %9 : vector<1x128xf32> to vector<32x128xf32>
    %26 = arith.mulf %24, %25 : vector<32x128xf32>
    %27 = vector.broadcast %10 : vector<1x128xf32> to vector<32x128xf32>
    %28 = arith.addf %26, %27 : vector<32x128xf32>
    %cst_20 = arith.constant 0.000000e+00 : f32
    %29 = vector.broadcast %cst_20 : f32 to vector<32x128xf32>
    %30 = arith.maximumf %28, %29 : vector<32x128xf32>
    %cst_21 = arith.constant dense<0.000000e+00> : vector<32x128xf32>
    %31 = tpu.matmul %1, %30, %cst_21 {dimension_numbers = #tpu.dot_dimension_numbers<[1], [0], [0], [1], [0, 0, 1, 1], [], []>} : vector<32x32xf32>, vector<32x128xf32>, vector<32x128xf32> -> vector<32x128xf32>
    %cst_22 = arith.constant dense<0.000000e+00> : vector<32x128xf32>
    %32 = tpu.matmul %2, %30, %cst_22 {dimension_numbers = #tpu.dot_dimension_numbers<[1], [0], [0], [1], [0, 0, 1, 1], [], []>} : vector<32x32xf32>, vector<32x128xf32>, vector<32x128xf32> -> vector<32x128xf32>
    %33 = tpu.concatenate %31, %30, %32 in 1 : vector<32x128xf32>, vector<32x128xf32>, vector<32x128xf32> -> vector<32x384xf32>
    %c0_23 = arith.constant 0 : index
    %c0_24 = arith.constant 0 : index
    %34 = vector.load %arg3[%c0_23, %c0_24] : memref<384x128xf32, #tpu.memory_space<vmem>>, vector<384x128xf32>
    %cst_25 = arith.constant dense<0.000000e+00> : vector<32x128xf32>
    %35 = tpu.matmul %33, %34, %cst_25 {dimension_numbers = #tpu.dot_dimension_numbers<[1], [0], [0], [1], [0, 0, 1, 1], [], []>} : vector<32x384xf32>, vector<384x128xf32>, vector<32x128xf32> -> vector<32x128xf32>
    %c0_26 = arith.constant 0 : index
    %c0_27 = arith.constant 0 : index
    %36 = vector.load %arg9[%c0_26, %c0_27] : memref<1x128xf32, #tpu.memory_space<vmem>>, vector<1x128xf32>
    %c0_28 = arith.constant 0 : index
    %c0_29 = arith.constant 0 : index
    %37 = vector.load %arg10[%c0_28, %c0_29] : memref<1x128xf32, #tpu.memory_space<vmem>>, vector<1x128xf32>
    %cst_30 = arith.constant dense<0.000000e+00> : vector<32x128xf32>
    %38 = tpu.matmul %35, %3, %cst_30 {dimension_numbers = #tpu.dot_dimension_numbers<[1], [0], [0], [1], [0, 0, 1, 1], [], []>} : vector<32x128xf32>, vector<128x128xf32>, vector<32x128xf32> -> vector<32x128xf32>
    %cst_31 = arith.constant dense<0.000000e+00> : vector<128xf32>
    %39 = vector.multi_reduction <add>, %38, %cst_31 [0] : vector<32x128xf32> to vector<128xf32>
    %40 = vector.shape_cast %39 : vector<128xf32> to vector<1x128xf32>
    %41 = vector.broadcast %40 : vector<1x128xf32> to vector<32x128xf32>
    %42 = arith.subf %35, %41 : vector<32x128xf32>
    %43 = arith.mulf %42, %42 : vector<32x128xf32>
    %cst_32 = arith.constant dense<0.000000e+00> : vector<32x128xf32>
    %44 = tpu.matmul %43, %3, %cst_32 {dimension_numbers = #tpu.dot_dimension_numbers<[1], [0], [0], [1], [0, 0, 1, 1], [], []>} : vector<32x128xf32>, vector<128x128xf32>, vector<32x128xf32> -> vector<32x128xf32>
    %cst_33 = arith.constant dense<0.000000e+00> : vector<128xf32>
    %45 = vector.multi_reduction <add>, %44, %cst_33 [0] : vector<32x128xf32> to vector<128xf32>
    %46 = vector.shape_cast %45 : vector<128xf32> to vector<1x128xf32>
    %cst_34 = arith.constant 9.99999974E-6 : f32
    %47 = vector.broadcast %cst_34 : f32 to vector<1x128xf32>
    %48 = arith.addf %46, %47 : vector<1x128xf32>
    %49 = math.rsqrt %48 : vector<1x128xf32>
    %50 = vector.broadcast %49 : vector<1x128xf32> to vector<32x128xf32>
    %51 = arith.mulf %42, %50 : vector<32x128xf32>
    %52 = vector.broadcast %36 : vector<1x128xf32> to vector<32x128xf32>
    %53 = arith.mulf %51, %52 : vector<32x128xf32>
    %54 = vector.broadcast %37 : vector<1x128xf32> to vector<32x128xf32>
    %55 = arith.addf %53, %54 : vector<32x128xf32>
    %56 = arith.addf %55, %0 : vector<32x128xf32>
    %cst_35 = arith.constant 0.000000e+00 : f32
    %57 = vector.broadcast %cst_35 : f32 to vector<32x128xf32>
    %58 = arith.maximumf %56, %57 : vector<32x128xf32>
    %c0_36 = arith.constant 0 : index
    %c0_37 = arith.constant 0 : index
    %59 = vector.load %arg11[%c0_36, %c0_37] : memref<32x128xf32, #tpu.memory_space<vmem>>, vector<32x128xf32>
    tpu.vector_store %arg11[%c0_36, %c0_37], %58 {strides = array<i32>} : memref<32x128xf32, #tpu.memory_space<vmem>>, vector<32x128xf32>,
    return
  }
  func.func @transform_0(%arg0: i32) -> (i32, i32) {
    %c0_i32 = arith.constant 0 : i32
    %c0_i32_0 = arith.constant 0 : i32
    %c0_i32_1 = arith.constant 0 : i32
    return %c0_i32, %c0_i32_0 : i32, i32
  }
  func.func @transform_1(%arg0: i32) -> (i32, i32) {
    %c0_i32 = arith.constant 0 : i32
    %c0_i32_0 = arith.constant 0 : i32
    %c0_i32_1 = arith.constant 0 : i32
    return %c0_i32, %c0_i32_0 : i32, i32
  }
  func.func @transform_2(%arg0: i32) -> (i32, i32) {
    %c0_i32 = arith.constant 0 : i32
    %c0_i32_0 = arith.constant 0 : i32
    %c0_i32_1 = arith.constant 0 : i32
    return %c0_i32, %c0_i32_0 : i32, i32
  }
  func.func @transform_3(%arg0: i32) -> (i32, i32) {
    %c0_i32 = arith.constant 0 : i32
    %c0_i32_0 = arith.constant 0 : i32
    %c0_i32_1 = arith.constant 0 : i32
    return %c0_i32, %c0_i32_0 : i32, i32
  }
  func.func @transform_4(%arg0: i32) -> (i32, i32) {
    %c0_i32 = arith.constant 0 : i32
    %c0_i32_0 = arith.constant 0 : i32
    %c0_i32_1 = arith.constant 0 : i32
    return %c0_i32, %c0_i32_0 : i32, i32
  }
  func.func @transform_5(%arg0: i32) -> (i32, i32) {
    %c0_i32 = arith.constant 0 : i32
    %c0_i32_0 = arith.constant 0 : i32
    %c0_i32_1 = arith.constant 0 : i32
    return %c0_i32, %c0_i32_0 : i32, i32
  }
  func.func @transform_6(%arg0: i32) -> (i32, i32) {
    %c0_i32 = arith.constant 0 : i32
    %c0_i32_0 = arith.constant 0 : i32
    %c0_i32_1 = arith.constant 0 : i32
    return %c0_i32, %c0_i32_0 : i32, i32
  }
  func.func @transform_7(%arg0: i32) -> (i32, i32) {
    %c0_i32 = arith.constant 0 : i32
    %c0_i32_0 = arith.constant 0 : i32
    %c0_i32_1 = arith.constant 0 : i32
    return %c0_i32, %c0_i32_0 : i32, i32
  }
  func.func @transform_8(%arg0: i32) -> (i32, i32) {
    %c0_i32 = arith.constant 0 : i32
    %c0_i32_0 = arith.constant 0 : i32
    %c0_i32_1 = arith.constant 0 : i32
    return %c0_i32, %c0_i32_0 : i32, i32
  }
  func.func @transform_9(%arg0: i32) -> (i32, i32) {
    %c0_i32 = arith.constant 0 : i32
    %c0_i32_0 = arith.constant 0 : i32
    %c0_i32_1 = arith.constant 0 : i32
    return %c0_i32, %c0_i32_0 : i32, i32
  }
  func.func @transform_10(%arg0: i32) -> (i32, i32) {
    %c0_i32 = arith.constant 0 : i32
    %c0_i32_0 = arith.constant 0 : i32
    %c0_i32_1 = arith.constant 0 : i32
    return %c0_i32, %c0_i32_0 : i32, i32
  }
}

</mosaic_0001>

<llo_original>
// kernel: tpu_custom_call.1
$region0: #{tpu_custom_call.1}
  #allocation0 [shape = 'u32[]', space=smem, size = 0x4, offset = 0x4, fixed_abs, tag = 'smem constant byte address 0x4 - core index']
  #allocation1 [shape = 'u32[72,128]{1,0:T(1,128)}', space=vmem, size = 0x9000, scoped, tag = 'internal scratch']
  %s0 = inlined_call_operand.hbm [shape: f32[32,128], index: 0, kind: input, shape index: {}]
  %s1 = inlined_call_operand.hbm [shape: f32[384,128], index: 1, kind: input, shape index: {}]
  %s2 = inlined_call_operand.hbm [shape: f32[384,128], index: 2, kind: input, shape index: {}]
  %s3 = inlined_call_operand.hbm [shape: f32[32,32], index: 3, kind: input, shape index: {}]
  %s4 = inlined_call_operand.hbm [shape: f32[32,32], index: 4, kind: input, shape index: {}]
  %s5 = inlined_call_operand.hbm [shape: f32[128,128], index: 5, kind: input, shape index: {}]
  %s6 = inlined_call_operand.vmem [shape: f32[1,128], index: 6, kind: input, shape index: {}]
  %s7 = inlined_call_operand.vmem [shape: f32[1,128], index: 7, kind: input, shape index: {}]
  %s8 = inlined_call_operand.vmem [shape: f32[1,128], index: 8, kind: input, shape index: {}]
  %s9 = inlined_call_operand.vmem [shape: f32[1,128], index: 9, kind: input, shape index: {}]
  %s10 = inlined_call_operand.hbm [shape: f32[32,128], index: 10, kind: output, shape index: {}]
  %s11 = sld [smem:[#allocation0]]
  $region74: #{tpu_custom_call.1} parent=0
    _
  %s13 = ssub.s32 1, %s11
  %s14 = scalar_select 0, %s13, %s11
  $region1: #{tpu_custom_call.1} parent=0
    #allocation2 [shape = 'u8[16384]{0}', space=vmem, size = 0x4000, scoped, tag = 'input window, operand 0, single buffered']
    #allocation3 [shape = 's32[1]{0}', space=sflag, size = 0x4, scoped, tag = 'scoped memory for tpu_custom_call.1']
    #allocation4 [shape = 's32[1]{0}', space=sflag, size = 0x4, scoped, tag = 'scoped memory for tpu_custom_call.1']
    #allocation5 [shape = 'u8[196608]{0}', space=vmem, size = 0x30000, scoped, tag = 'input window, operand 1, single buffered']
    #allocation6 [shape = 's32[1]{0}', space=sflag, size = 0x4, scoped, tag = 'scoped memory for tpu_custom_call.1']
    #allocation7 [shape = 'u8[196608]{0}', space=vmem, size = 0x30000, scoped, tag = 'input window, operand 2, single buffered']
    #allocation8 [shape = 'u8[16384]{0}', space=vmem, size = 0x4000, scoped, tag = 'input window, operand 3, single buffered']
    #allocation9 [shape = 's32[1]{0}', space=sflag, size = 0x4, scoped, tag = 'scoped memory for tpu_custom_call.1']
    #allocation10 [shape = 'u8[16384]{0}', space=vmem, size = 0x4000, scoped, tag = 'input window, operand 4, single buffered']
    #allocation11 [shape = 'u8[65536]{0}', space=vmem, size = 0x10000, scoped, tag = 'input window, operand 5, single buffered']
    #allocation12 [shape = 's32[1]{0}', space=sflag, size = 0x4, scoped, tag = 'scoped memory for tpu_custom_call.1']
    #allocation13 [shape = 'u8[16384]{0}', space=vmem, size = 0x4000, scoped, tag = 'output window, operand 0, single buffered']
    %15 = vsyncpa [#allocation3], 0
    %16 = vsyncpa [#allocation6], 0
    %17 = vsyncpa [#allocation9], 0
    %18 = vsyncpa [#allocation12], 0
    %19 = vsyncpa [#allocation4], 0
    // Predicated region
    $region2: #{tpu_custom_call.1} parent=1 // pred_check
      _
    $region3: #{tpu_custom_call.1} parent=1 // pred_check_branch
      %21 = sbr.rel (0) target = $region5
    $region4: #{tpu_custom_call.1} parent=1 // pred_region
      %23 = vsyncadd [#allocation3], 0
      %s24 = sshll.u32 %s0, 4
      %s25 = int_to_ptr.hbm [resolvable:$true] %s24
      %s26 = sshll.u32 [#allocation2], 4
      %s27 = int_to_ptr.vmem [resolvable:$true] %s26
      %32 = dma.hbm_to_vmem [thread:$0]  %s25, 512, %s27, [#allocation3], 128, 128, 8
    $region5: #{tpu_custom_call.1} parent=1 // pred_fallthru
      _
    // Predicated region
    $region6: #{tpu_custom_call.1} parent=1 // pred_check
      _
    $region7: #{tpu_custom_call.1} parent=1 // pred_check_branch
      %34 = sbr.rel (0) target = $region9
    $region8: #{tpu_custom_call.1} parent=1 // pred_region
      %36 = vsyncadd [#allocation6], 0
      %s37 = sshll.u32 %s1, 4
      %s38 = int_to_ptr.hbm [resolvable:$true] %s37
      %s39 = sshll.u32 [#allocation5], 4
      %s40 = int_to_ptr.vmem [resolvable:$true] %s39
      %45 = dma.hbm_to_vmem [thread:$0]  %s38, 6144, %s40, [#allocation6], 128, 128, 8
    $region9: #{tpu_custom_call.1} parent=1 // pred_fallthru
      _
    // Predicated region
    $region10: #{tpu_custom_call.1} parent=1 // pred_check
      _
    $region11: #{tpu_custom_call.1} parent=1 // pred_check_branch
      %47 = sbr.rel (0) target = $region13
    $region12: #{tpu_custom_call.1} parent=1 // pred_region
      %49 = vsyncadd [#allocation6], 0
      %s50 = sshll.u32 %s2, 4
      %s51 = int_to_ptr.hbm [resolvable:$true] %s50
      %s52 = sshll.u32 [#allocation7], 4
      %s53 = int_to_ptr.vmem [resolvable:$true] %s52
      %58 = dma.hbm_to_vmem [thread:$0]  %s51, 6144, %s53, [#allocation6], 128, 128, 8
    $region13: #{tpu_custom_call.1} parent=1 // pred_fallthru
      _
    // Predicated region
    $region14: #{tpu_custom_call.1} parent=1 // pred_check
      _
    $region15: #{tpu_custom_call.1} parent=1 // pred_check_branch
      %60 = sbr.rel (0) target = $region17
    $region16: #{tpu_custom_call.1} parent=1 // pred_region
      %62 = vsyncadd [#allocation9], 0
      %s63 = sshll.u32 %s3, 4
      %s64 = int_to_ptr.hbm [resolvable:$true] %s63
      %s65 = sshll.u32 [#allocation8], 4
      %s66 = int_to_ptr.vmem [resolvable:$true] %s65
      %71 = dma.hbm_to_vmem [thread:$0]  %s64, 512, %s66, [#allocation9], 128, 128, 8
    $region17: #{tpu_custom_call.1} parent=1 // pred_fallthru
      _
    // Predicated region
    $region18: #{tpu_custom_call.1} parent=1 // pred_check
      _
    $region19: #{tpu_custom_call.1} parent=1 // pred_check_branch
      %73 = sbr.rel (0) target = $region21
    $region20: #{tpu_custom_call.1} parent=1 // pred_region
      %75 = vsyncadd [#allocation9], 0
      %s76 = sshll.u32 %s4, 4
      %s77 = int_to_ptr.hbm [resolvable:$true] %s76
      %s78 = sshll.u32 [#allocation10], 4
      %s79 = int_to_ptr.vmem [resolvable:$true] %s78
      %84 = dma.hbm_to_vmem [thread:$0]  %s77, 512, %s79, [#allocation9], 128, 128, 8
    $region21: #{tpu_custom_call.1} parent=1 // pred_fallthru
      _
    // Predicated region
    $region22: #{tpu_custom_call.1} parent=1 // pred_check
      _
    $region23: #{tpu_custom_call.1} parent=1 // pred_check_branch
      %86 = sbr.rel (0) target = $region25
    $region24: #{tpu_custom_call.1} parent=1 // pred_region
      %88 = vsyncadd [#allocation12], 0
      %s89 = sshll.u32 %s5, 4
      %s90 = int_to_ptr.hbm [resolvable:$true] %s89
      %s91 = sshll.u32 [#allocation11], 4
      %s92 = int_to_ptr.vmem [resolvable:$true] %s91
      %97 = dma.hbm_to_vmem [thread:$0]  %s90, 2048, %s92, [#allocation12], 128, 128, 8
    $region25: #{tpu_custom_call.1} parent=1 // pred_fallthru
      _
    // Predicated region
    $region26: #{tpu_custom_call.1} parent=1 // pred_check
      _
    $region27: #{tpu_custom_call.1} parent=1 // pred_check_branch
      %99 = sbr.rel (0) target = $region29
    $region28: #{tpu_custom_call.1} parent=1 // pred_region
      _
    $region29: #{tpu_custom_call.1} parent=1 // pred_fallthru
      _
    // Predicated region
    $region30: #{tpu_custom_call.1} parent=1 // pred_check
      _
    $region31: #{tpu_custom_call.1} parent=1 // pred_check_branch
      %101 = sbr.rel (0) target = $region33
    $region32: #{tpu_custom_call.1} parent=1 // pred_region
      _
    $region33: #{tpu_custom_call.1} parent=1 // pred_fallthru
      _
    // Predicated region
    $region34: #{tpu_custom_call.1} parent=1 // pred_check
      _
    $region35: #{tpu_custom_call.1} parent=1 // pred_check_branch
      %103 = sbr.rel (0) target = $region37
    $region36: #{tpu_custom_call.1} parent=1 // pred_region
      _
    $region37: #{tpu_custom_call.1} parent=1 // pred_fallthru
      _
    // Predicated region
    $region38: #{tpu_custom_call.1} parent=1 // pred_check
      _
    $region39: #{tpu_custom_call.1} parent=1 // pred_check_branch
      %105 = sbr.rel (0) target = $region41
    $region40: #{tpu_custom_call.1} parent=1 // pred_region
      _
    $region41: #{tpu_custom_call.1} parent=1 // pred_fallthru
      _
    // Predicated region
    $region42: #{tpu_custom_call.1} parent=1 // pred_check
      _
    $region43: #{tpu_custom_call.1} parent=1 // pred_check_branch
      %107 = sbr.rel (0) target = $region45
    $region44: #{tpu_custom_call.1} parent=1 // pred_region
      %109 = dma.done [#allocation3], 512
    $region45: #{tpu_custom_call.1} parent=1 // pred_fallthru
      _
    // Predicated region
    $region46: #{tpu_custom_call.1} parent=1 // pred_check
      _
    $region47: #{tpu_custom_call.1} parent=1 // pred_check_branch
      %111 = sbr.rel (0) target = $region49
    $region48: #{tpu_custom_call.1} parent=1 // pred_region
      %113 = dma.done [#allocation6], 6144
    $region49: #{tpu_custom_call.1} parent=1 // pred_fallthru
      _
    // Predicated region
    $region50: #{tpu_custom_call.1} parent=1 // pred_check
      _
    $region51: #{tpu_custom_call.1} parent=1 // pred_check_branch
      %115 = sbr.rel (0) target = $region53
    $region52: #{tpu_custom_call.1} parent=1 // pred_region
      %117 = dma.done [#allocation6], 6144
    $region53: #{tpu_custom_call.1} parent=1 // pred_fallthru
      _
    // Predicated region
    $region54: #{tpu_custom_call.1} parent=1 // pred_check
      _
    $region55: #{tpu_custom_call.1} parent=1 // pred_check_branch
      %119 = sbr.rel (0) target = $region57
    $region56: #{tpu_custom_call.1} parent=1 // pred_region
      %121 = dma.done [#allocation9], 512
    $region57: #{tpu_custom_call.1} parent=1 // pred_fallthru
      _
    // Predicated region
    $region58: #{tpu_custom_call.1} parent=1 // pred_check
      _
    $region59: #{tpu_custom_call.1} parent=1 // pred_check_branch
      %123 = sbr.rel (0) target = $region61
    $region60: #{tpu_custom_call.1} parent=1 // pred_region
      %125 = dma.done [#allocation9], 512
    $region61: #{tpu_custom_call.1} parent=1 // pred_fallthru
      _
    // Predicated region
    $region62: #{tpu_custom_call.1} parent=1 // pred_check
      _
    $region63: #{tpu_custom_call.1} parent=1 // pred_check_branch
      %127 = sbr.rel (0) target = $region65
    $region64: #{tpu_custom_call.1} parent=1 // pred_region
      %129 = dma.done [#allocation12], 2048
    $region65: #{tpu_custom_call.1} parent=1 // pred_fallthru
      _
    %v130 = vld [vmem:[#allocation2] sm:$0xff]
    %v131 = vld [vmem:[#allocation2 + $0x8] sm:$0xff]
    %v132 = vld [vmem:[#allocation2 + $0x10] sm:$0xff]
    %v133 = vld [vmem:[#allocation2 + $0x18] sm:$0xff]
    %v134 = vld [vmem:[#allocation8] sm:$0xff]
    %v135 = vld [vmem:[#allocation8 + $0x8] sm:$0xff]
    %v136 = vld [vmem:[#allocation8 + $0x10] sm:$0xff]
    %v137 = vld [vmem:[#allocation8 + $0x18] sm:$0xff]
    %v138 = vld [vmem:[#allocation10] sm:$0xff]
    %v139 = vld [vmem:[#allocation10 + $0x8] sm:$0xff]
    %v140 = vld [vmem:[#allocation10 + $0x10] sm:$0xff]
    %v141 = vld [vmem:[#allocation10 + $0x18] sm:$0xff]
    %v142 = vld [vmem:[#allocation11] sm:$0xff]
    %v143 = vld [vmem:[#allocation11 + $0x8] sm:$0xff]
    %v144 = vld [vmem:[#allocation11 + $0x10] sm:$0xff]
    %v145 = vld [vmem:[#allocation11 + $0x18] sm:$0xff]
    %v146 = vld [vmem:[#allocation11 + $0x20] sm:$0xff]
    %v147 = vld [vmem:[#allocation11 + $0x28] sm:$0xff]
    %v148 = vld [vmem:[#allocation11 + $0x30] sm:$0xff]
    %v149 = vld [vmem:[#allocation11 + $0x38] sm:$0xff]
    %v150 = vld [vmem:[#allocation11 + $0x40] sm:$0xff]
    %v151 = vld [vmem:[#allocation11 + $0x48] sm:$0xff]
    %v152 = vld [vmem:[#allocation11 + $0x50] sm:$0xff]
    %v153 = vld [vmem:[#allocation11 + $0x58] sm:$0xff]
    %v154 = vld [vmem:[#allocation11 + $0x60] sm:$0xff]
    %v155 = vld [vmem:[#allocation11 + $0x68] sm:$0xff]
    %v156 = vld [vmem:[#allocation11 + $0x70] sm:$0xff]
    %v157 = vld [vmem:[#allocation11 + $0x78] sm:$0xff]
    %vm158 = vcmask 261120
    %v160 = vsel %vm158, %v134, 0
    %v163 = vsel %vm158, %v135, 0
    %v166 = vsel %vm158, %v136, 0
    %v169 = vsel %vm158, %v137, 0
    %171 = vmatpush.msra.mxu0 0.0
    %172 = vmatpush.msra.mxu0 0.0
    %173 = vmatpush.msra.mxu0 0.0
    %174 = vmatpush.msra.mxu0 0.0
    %175 = vmatpush.msra.mxu0 0.0
    %176 = vmatpush.msra.mxu0 0.0
    %177 = vmatpush.msra.mxu0 0.0
    %178 = vmatpush.msra.mxu0 0.0
    %179 = vmatpush.msra.mxu0 0.0
    %180 = vmatpush.msra.mxu0 0.0
    %181 = vmatpush.msra.mxu0 0.0
    %182 = vmatpush.msra.mxu0 0.0
    %183 = vmatpush.msra.mxu0 %v133
    %184 = vmatpush.msra.mxu0 %v132
    %185 = vmatpush.msra.mxu0 %v131
    %186 = vmatpush.msra.mxu0 %v130
    %187 = vmatmul.f32.gmra.mxu0 %v160
    %v188 = vpop.f32.mrf.mxu0
    %v189 = vadd.f32 0.0, %v188
    %190 = vmatmul.f32.gmra.mxu0 %v163
    %v191 = vpop.f32.mrf.mxu0
    %v192 = vadd.f32 0.0, %v191
    %193 = vmatmul.f32.gmra.mxu0 %v166
    %v194 = vpop.f32.mrf.mxu0
    %v195 = vadd.f32 0.0, %v194
    %196 = vmatmul.f32.gmra.mxu0 %v169
    %v197 = vpop.f32.mrf.mxu0
    %v198 = vadd.f32 0.0, %v197
    %199 = vdwg.mxu0
    %v201 = vsel %vm158, %v138, 0
    %v204 = vsel %vm158, %v139, 0
    %v207 = vsel %vm158, %v140, 0
    %v210 = vsel %vm158, %v141, 0
    %212 = vmatpush.msra.mxu0 0.0
    %213 = vmatpush.msra.mxu0 0.0
    %214 = vmatpush.msra.mxu0 0.0
    %215 = vmatpush.msra.mxu0 0.0
    %216 = vmatpush.msra.mxu0 0.0
    %217 = vmatpush.msra.mxu0 0.0
    %218 = vmatpush.msra.mxu0 0.0
    %219 = vmatpush.msra.mxu0 0.0
    %220 = vmatpush.msra.mxu0 0.0
    %221 = vmatpush.msra.mxu0 0.0
    %222 = vmatpush.msra.mxu0 0.0
    %223 = vmatpush.msra.mxu0 0.0
    %224 = vmatpush.msra.mxu0 %v133
    %225 = vmatpush.msra.mxu0 %v132
    %226 = vmatpush.msra.mxu0 %v131
    %227 = vmatpush.msra.mxu0 %v130
    %228 = vmatmul.f32.gmra.mxu0 %v201
    %v229 = vpop.f32.mrf.mxu0
    %v230 = vadd.f32 0.0, %v229
    %231 = vmatmul.f32.gmra.mxu0 %v204
    %v232 = vpop.f32.mrf.mxu0
    %v233 = vadd.f32 0.0, %v232
    %234 = vmatmul.f32.gmra.mxu0 %v207
    %v235 = vpop.f32.mrf.mxu0
    %v236 = vadd.f32 0.0, %v235
    %237 = vmatmul.f32.gmra.mxu0 %v210
    %v238 = vpop.f32.mrf.mxu0
    %v239 = vadd.f32 0.0, %v238
    %240 = vdwg.mxu0
    %v241 = vld [vmem:[#allocation5] sm:$0xff]
    %v242 = vld [vmem:[#allocation5 + $0x8] sm:$0xff]
    %v243 = vld [vmem:[#allocation5 + $0x10] sm:$0xff]
    %v244 = vld [vmem:[#allocation5 + $0x18] sm:$0xff]
    %v245 = vld [vmem:[#allocation5 + $0x20] sm:$0xff]
    %v246 = vld [vmem:[#allocation5 + $0x28] sm:$0xff]
    %v247 = vld [vmem:[#allocation5 + $0x30] sm:$0xff]
    %v248 = vld [vmem:[#allocation5 + $0x38] sm:$0xff]
    %v249 = vld [vmem:[#allocation5 + $0x40] sm:$0xff]
    %v250 = vld [vmem:[#allocation5 + $0x48] sm:$0xff]
    %v251 = vld [vmem:[#allocation5 + $0x50] sm:$0xff]
    %v252 = vld [vmem:[#allocation5 + $0x58] sm:$0xff]
    %v253 = vld [vmem:[#allocation5 + $0x60] sm:$0xff]
    %v254 = vld [vmem:[#allocation5 + $0x68] sm:$0xff]
    %v255 = vld [vmem:[#allocation5 + $0x70] sm:$0xff]
    %v256 = vld [vmem:[#allocation5 + $0x78] sm:$0xff]
    %v257 = vld [vmem:[#allocation5 + $0x80] sm:$0xff]
    %v258 = vld [vmem:[#allocation5 + $0x88] sm:$0xff]
    %v259 = vld [vmem:[#allocation5 + $0x90] sm:$0xff]
    %v260 = vld [vmem:[#allocation5 + $0x98] sm:$0xff]
    %v261 = vld [vmem:[#allocation5 + $0xa0] sm:$0xff]
    %v262 = vld [vmem:[#allocation5 + $0xa8] sm:$0xff]
    %v263 = vld [vmem:[#allocation5 + $0xb0] sm:$0xff]
    %v264 = vld [vmem:[#allocation5 + $0xb8] sm:$0xff]
    %v265 = vld [vmem:[#allocation5 + $0xc0] sm:$0xff]
    %v266 = vld [vmem:[#allocation5 + $0xc8] sm:$0xff]
    %v267 = vld [vmem:[#allocation5 + $0xd0] sm:$0xff]
    %v268 = vld [vmem:[#allocation5 + $0xd8] sm:$0xff]
    %v269 = vld [vmem:[#allocation5 + $0xe0] sm:$0xff]
    %v270 = vld [vmem:[#allocation5 + $0xe8] sm:$0xff]
    %v271 = vld [vmem:[#allocation5 + $0xf0] sm:$0xff]
    %v272 = vld [vmem:[#allocation5 + $0xf8] sm:$0xff]
    %v273 = vld [vmem:[#allocation5 + $0x100] sm:$0xff]
    %v274 = vld [vmem:[#allocation5 + $0x108] sm:$0xff]
    %v275 = vld [vmem:[#allocation5 + $0x110] sm:$0xff]
    %v276 = vld [vmem:[#allocation5 + $0x118] sm:$0xff]
    %v277 = vld [vmem:[#allocation5 + $0x120] sm:$0xff]
    %v278 = vld [vmem:[#allocation5 + $0x128] sm:$0xff]
    %v279 = vld [vmem:[#allocation5 + $0x130] sm:$0xff]
    %v280 = vld [vmem:[#allocation5 + $0x138] sm:$0xff]
    %v281 = vld [vmem:[#allocation5 + $0x140] sm:$0xff]
    %v282 = vld [vmem:[#allocation5 + $0x148] sm:$0xff]
    %v283 = vld [vmem:[#allocation5 + $0x150] sm:$0xff]
    %v284 = vld [vmem:[#allocation5 + $0x158] sm:$0xff]
    %v285 = vld [vmem:[#allocation5 + $0x160] sm:$0xff]
    %v286 = vld [vmem:[#allocation5 + $0x168] sm:$0xff]
    %v287 = vld [vmem:[#allocation5 + $0x170] sm:$0xff]
    %v288 = vld [vmem:[#allocation5 + $0x178] sm:$0xff]
    %289 = vmatpush.msra.mxu0 %v256
    %290 = vmatpush.msra.mxu0 %v255
    %291 = vmatpush.msra.mxu0 %v254
    %292 = vmatpush.msra.mxu0 %v253
    %293 = vmatpush.msra.mxu0 %v252
    %294 = vmatpush.msra.mxu0 %v251
    %295 = vmatpush.msra.mxu0 %v250
    %296 = vmatpush.msra.mxu0 %v249
    %297 = vmatpush.msra.mxu0 %v248
    %298 = vmatpush.msra.mxu0 %v247
    %299 = vmatpush.msra.mxu0 %v246
    %300 = vmatpush.msra.mxu0 %v245
    %301 = vmatpush.msra.mxu0 %v244
    %302 = vmatpush.msra.mxu0 %v243
    %303 = vmatpush.msra.mxu0 %v242
    %304 = vmatpush.msra.mxu0 %v241
    %305 = vmatmul.f32.gmra.mxu0 %v189
    %v306 = vpop.f32.mrf.mxu0
    %v307 = vadd.f32 0.0, %v306
    %308 = vmatmul.f32.gmra.mxu0 %v192
    %v309 = vpop.f32.mrf.mxu0
    %v310 = vadd.f32 0.0, %v309
    %311 = vmatmul.f32.gmra.mxu0 %v195
    %v312 = vpop.f32.mrf.mxu0
    %v313 = vadd.f32 0.0, %v312
    %314 = vmatmul.f32.gmra.mxu0 %v198
    %v315 = vpop.f32.mrf.mxu0
    %v316 = vadd.f32 0.0, %v315
    %317 = vdwg.mxu0
    %318 = vmatpush.msra.mxu0 %v272
    %319 = vmatpush.msra.mxu0 %v271
    %320 = vmatpush.msra.mxu0 %v270
    %321 = vmatpush.msra.mxu0 %v269
    %322 = vmatpush.msra.mxu0 %v268
    %323 = vmatpush.msra.mxu0 %v267
    %324 = vmatpush.msra.mxu0 %v266
    %325 = vmatpush.msra.mxu0 %v265
    %326 = vmatpush.msra.mxu0 %v264
    %327 = vmatpush.msra.mxu0 %v263
    %328 = vmatpush.msra.mxu0 %v262
    %329 = vmatpush.msra.mxu0 %v261
    %330 = vmatpush.msra.mxu0 %v260
    %331 = vmatpush.msra.mxu0 %v259
    %332 = vmatpush.msra.mxu0 %v258
    %333 = vmatpush.msra.mxu0 %v257
    %334 = vmatmul.f32.gmra.mxu0 %v130
    %v335 = vpop.f32.mrf.mxu0
    %v336 = vadd.f32 %v307, %v335
    %337 = vmatmul.f32.gmra.mxu0 %v131
    %v338 = vpop.f32.mrf.mxu0
    %v339 = vadd.f32 %v310, %v338
    %340 = vmatmul.f32.gmra.mxu0 %v132
    %v341 = vpop.f32.mrf.mxu0
    %v342 = vadd.f32 %v313, %v341
    %343 = vmatmul.f32.gmra.mxu0 %v133
    %v344 = vpop.f32.mrf.mxu0
    %v345 = vadd.f32 %v316, %v344
    %346 = vdwg.mxu0
    %347 = vmatpush.msra.mxu0 %v288
    %348 = vmatpush.msra.mxu0 %v287
    %349 = vmatpush.msra.mxu0 %v286
    %350 = vmatpush.msra.mxu0 %v285
    %351 = vmatpush.msra.mxu0 %v284
    %352 = vmatpush.msra.mxu0 %v283
    %353 = vmatpush.msra.mxu0 %v282
    %354 = vmatpush.msra.mxu0 %v281
    %355 = vmatpush.msra.mxu0 %v280
    %356 = vmatpush.msra.mxu0 %v279
    %357 = vmatpush.msra.mxu0 %v278
    %358 = vmatpush.msra.mxu0 %v277
    %359 = vmatpush.msra.mxu0 %v276
    %360 = vmatpush.msra.mxu0 %v275
    %361 = vmatpush.msra.mxu0 %v274
    %362 = vmatpush.msra.mxu0 %v273
    %363 = vmatmul.f32.gmra.mxu0 %v230
    %v364 = vpop.f32.mrf.mxu0
    %v365 = vadd.f32 %v336, %v364
    %366 = vmatmul.f32.gmra.mxu0 %v233
    %v367 = vpop.f32.mrf.mxu0
    %v368 = vadd.f32 %v339, %v367
    %369 = vmatmul.f32.gmra.mxu0 %v236
    %v370 = vpop.f32.mrf.mxu0
    %v371 = vadd.f32 %v342, %v370
    %372 = vmatmul.f32.gmra.mxu0 %v239
    %v373 = vpop.f32.mrf.mxu0
    %v374 = vadd.f32 %v345, %v373
    %375 = vdwg.mxu0
    %v376 = vld [vmem:[%s6] sm:$0x1]
    %v377 = vld [vmem:[%s7] sm:$0x1]
    %378 = vmatpush.msra.mxu0 %v157
    %379 = vmatpush.msra.mxu0 %v156
    %380 = vmatpush.msra.mxu0 %v155
    %381 = vmatpush.msra.mxu0 %v154
    %382 = vmatpush.msra.mxu0 %v153
    %383 = vmatpush.msra.mxu0 %v152
    %384 = vmatpush.msra.mxu0 %v151
    %385 = vmatpush.msra.mxu0 %v150
    %386 = vmatpush.msra.mxu0 %v149
    %387 = vmatpush.msra.mxu0 %v148
    %388 = vmatpush.msra.mxu0 %v147
    %389 = vmatpush.msra.mxu0 %v146
    %390 = vmatpush.msra.mxu0 %v145
    %391 = vmatpush.msra.mxu0 %v144
    %392 = vmatpush.msra.mxu0 %v143
    %393 = vmatpush.msra.mxu0 %v142
    %394 = vmatmul.f32.gmra.mxu0 %v365
    %v395 = vpop.f32.mrf.mxu0
    %v396 = vadd.f32 0.0, %v395
    %397 = vmatmul.f32.gmra.mxu0 %v368
    %v398 = vpop.f32.mrf.mxu0
    %v399 = vadd.f32 0.0, %v398
    %400 = vmatmul.f32.gmra.mxu0 %v371
    %v401 = vpop.f32.mrf.mxu0
    %v402 = vadd.f32 0.0, %v401
    %403 = vmatmul.f32.gmra.mxu0 %v374
    %v404 = vpop.f32.mrf.mxu0
    %v405 = vadd.f32 0.0, %v404
    %406 = vdwg.mxu0
    %v407 = vadd.f32 %v396, %v399
    %v408 = vadd.f32 %v407, %v402
    %v409 = vadd.f32 %v408, %v405
    %v410 = vrot.slane %v409, 4
    %v411 = vadd.f32 %v409, %v410
    %v412 = vrot.slane %v411, 2
    %v413 = vadd.f32 %v411, %v412
    %v414 = vrot.slane %v413, 1
    %v415 = vadd.f32 %v413, %v414
    %v416 = vsub.f32 %v365, %v415
    %v417 = vsub.f32 %v368, %v415
    %v418 = vsub.f32 %v371, %v415
    %v419 = vsub.f32 %v374, %v415
    %v420 = vmul.f32 %v416, %v416
    %v421 = vmul.f32 %v417, %v417
    %v422 = vmul.f32 %v418, %v418
    %v423 = vmul.f32 %v419, %v419
    %424 = vmatpush.msra.mxu0 %v157
    %425 = vmatpush.msra.mxu0 %v156
    %426 = vmatpush.msra.mxu0 %v155
    %427 = vmatpush.msra.mxu0 %v154
    %428 = vmatpush.msra.mxu0 %v153
    %429 = vmatpush.msra.mxu0 %v152
    %430 = vmatpush.msra.mxu0 %v151
    %431 = vmatpush.msra.mxu0 %v150
    %432 = vmatpush.msra.mxu0 %v149
    %433 = vmatpush.msra.mxu0 %v148
    %434 = vmatpush.msra.mxu0 %v147
    %435 = vmatpush.msra.mxu0 %v146
    %436 = vmatpush.msra.mxu0 %v145
    %437 = vmatpush.msra.mxu0 %v144
    %438 = vmatpush.msra.mxu0 %v143
    %439 = vmatpush.msra.mxu0 %v142
    %440 = vmatmul.f32.gmra.mxu0 %v420
    %v441 = vpop.f32.mrf.mxu0
    %v442 = vadd.f32 0.0, %v441
    %443 = vmatmul.f32.gmra.mxu0 %v421
    %v444 = vpop.f32.mrf.mxu0
    %v445 = vadd.f32 0.0, %v444
    %446 = vmatmul.f32.gmra.mxu0 %v422
    %v447 = vpop.f32.mrf.mxu0
    %v448 = vadd.f32 0.0, %v447
    %449 = vmatmul.f32.gmra.mxu0 %v423
    %v450 = vpop.f32.mrf.mxu0
    %v451 = vadd.f32 0.0, %v450
    %452 = vdwg.mxu0
    %v453 = vadd.f32 %v442, %v445
    %v454 = vadd.f32 %v453, %v448
    %v455 = vadd.f32 %v454, %v451
    %v456 = vrot.slane %v455, 4
    %v457 = vadd.f32 %v455, %v456
    %v458 = vrot.slane %v457, 2
    %v459 = vadd.f32 %v457, %v458
    %v460 = vrot.slane %v459, 1
    %v461 = vadd.f32 %v459, %v460
    %v462 = vadd.f32 %v461, 1e-05
    %v463 = vrsqrt.pop %v462
    %v464 = vmul.f32 %v463, %v462
    %v465 = vmul.f32 %v464, %v463
    %v466 = vmul.f32 0.5, %v465
    %v467 = vsub.f32 1.5, %v466
    %v468 = vmul.f32 %v463, %v467
    %vm469 = vweird.f32 %v462
    %vm470 = vweird.f32 %v463
    %vm471 = vmor %vm469, %vm470
    %v472 = vsel %vm471, %v463, %v468
    %v473 = vmul.f32 %v416, %v472
    %v474 = vmul.f32 %v417, %v472
    %v475 = vmul.f32 %v418, %v472
    %v476 = vmul.f32 %v419, %v472
    %v478 = vperm.slane %v376, 0
    %v480 = vmul.f32 %v473, %v478
    %v481 = vmul.f32 %v474, %v478
    %v482 = vmul.f32 %v475, %v478
    %v483 = vmul.f32 %v476, %v478
    %v485 = vperm.slane %v377, 0
    %v487 = vadd.f32 %v480, %v485
    %v488 = vadd.f32 %v481, %v485
    %v489 = vadd.f32 %v482, %v485
    %v490 = vadd.f32 %v483, %v485
    %v491 = vmax.f32 %v487, 0.0
    %v492 = vmax.f32 %v488, 0.0
    %v493 = vmax.f32 %v489, 0.0
    %v494 = vmax.f32 %v490, 0.0
    %495 = vmatpush.msra.mxu0 0.0
    %496 = vmatpush.msra.mxu0 0.0
    %497 = vmatpush.msra.mxu0 0.0
    %498 = vmatpush.msra.mxu0 0.0
    %499 = vmatpush.msra.mxu0 0.0
    %500 = vmatpush.msra.mxu0 0.0
    %501 = vmatpush.msra.mxu0 0.0
    %502 = vmatpush.msra.mxu0 0.0
    %503 = vmatpush.msra.mxu0 0.0
    %504 = vmatpush.msra.mxu0 0.0
    %505 = vmatpush.msra.mxu0 0.0
    %506 = vmatpush.msra.mxu0 0.0
    %507 = vmatpush.msra.mxu0 %v494
    %508 = vmatpush.msra.mxu0 %v493
    %509 = vmatpush.msra.mxu0 %v492
    %510 = vmatpush.msra.mxu0 %v491
    %511 = vmatmul.f32.gmra.mxu0 %v160
    %v512 = vpop.f32.mrf.mxu0
    %v513 = vadd.f32 0.0, %v512
    %514 = vmatmul.f32.gmra.mxu0 %v163
    %v515 = vpop.f32.mrf.mxu0
    %v516 = vadd.f32 0.0, %v515
    %517 = vmatmul.f32.gmra.mxu0 %v166
    %v518 = vpop.f32.mrf.mxu0
    %v519 = vadd.f32 0.0, %v518
    %520 = vmatmul.f32.gmra.mxu0 %v169
    %v521 = vpop.f32.mrf.mxu0
    %v522 = vadd.f32 0.0, %v521
    %523 = vdwg.mxu0
    %524 = vmatpush.msra.mxu0 0.0
    %525 = vmatpush.msra.mxu0 0.0
    %526 = vmatpush.msra.mxu0 0.0
    %527 = vmatpush.msra.mxu0 0.0
    %528 = vmatpush.msra.mxu0 0.0
    %529 = vmatpush.msra.mxu0 0.0
    %530 = vmatpush.msra.mxu0 0.0
    %531 = vmatpush.msra.mxu0 0.0
    %532 = vmatpush.msra.mxu0 0.0
    %533 = vmatpush.msra.mxu0 0.0
    %534 = vmatpush.msra.mxu0 0.0
    %535 = vmatpush.msra.mxu0 0.0
    %536 = vmatpush.msra.mxu0 %v494
    %537 = vmatpush.msra.mxu0 %v493
    %538 = vmatpush.msra.mxu0 %v492
    %539 = vmatpush.msra.mxu0 %v491
    %540 = vmatmul.f32.gmra.mxu0 %v201
    %v541 = vpop.f32.mrf.mxu0
    %v542 = vadd.f32 0.0, %v541
    %543 = vmatmul.f32.gmra.mxu0 %v204
    %v544 = vpop.f32.mrf.mxu0
    %v545 = vadd.f32 0.0, %v544
    %546 = vmatmul.f32.gmra.mxu0 %v207
    %v547 = vpop.f32.mrf.mxu0
    %v548 = vadd.f32 0.0, %v547
    %549 = vmatmul.f32.gmra.mxu0 %v210
    %v550 = vpop.f32.mrf.mxu0
    %v551 = vadd.f32 0.0, %v550
    %552 = vdwg.mxu0
    %v553 = vld [vmem:[#allocation7] sm:$0xff]
    %v554 = vld [vmem:[#allocation7 + $0x8] sm:$0xff]
    %v555 = vld [vmem:[#allocation7 + $0x10] sm:$0xff]
    %v556 = vld [vmem:[#allocation7 + $0x18] sm:$0xff]
    %v557 = vld [vmem:[#allocation7 + $0x20] sm:$0xff]
    %v558 = vld [vmem:[#allocation7 + $0x28] sm:$0xff]
    %v559 = vld [vmem:[#allocation7 + $0x30] sm:$0xff]
    %v560 = vld [vmem:[#allocation7 + $0x38] sm:$0xff]
    %v561 = vld [vmem:[#allocation7 + $0x40] sm:$0xff]
    %v562 = vld [vmem:[#allocation7 + $0x48] sm:$0xff]
    %v563 = vld [vmem:[#allocation7 + $0x50] sm:$0xff]
    %v564 = vld [vmem:[#allocation7 + $0x58] sm:$0xff]
    %v565 = vld [vmem:[#allocation7 + $0x60] sm:$0xff]
    %v566 = vld [vmem:[#allocation7 + $0x68] sm:$0xff]
    %v567 = vld [vmem:[#allocation7 + $0x70] sm:$0xff]
    %v568 = vld [vmem:[#allocation7 + $0x78] sm:$0xff]
    %v569 = vld [vmem:[#allocation7 + $0x80] sm:$0xff]
    %v570 = vld [vmem:[#allocation7 + $0x88] sm:$0xff]
    %v571 = vld [vmem:[#allocation7 + $0x90] sm:$0xff]
    %v572 = vld [vmem:[#allocation7 + $0x98] sm:$0xff]
    %v573 = vld [vmem:[#allocation7 + $0xa0] sm:$0xff]
    %v574 = vld [vmem:[#allocation7 + $0xa8] sm:$0xff]
    %v575 = vld [vmem:[#allocation7 + $0xb0] sm:$0xff]
    %v576 = vld [vmem:[#allocation7 + $0xb8] sm:$0xff]
    %v577 = vld [vmem:[#allocation7 + $0xc0] sm:$0xff]
    %v578 = vld [vmem:[#allocation7 + $0xc8] sm:$0xff]
    %v579 = vld [vmem:[#allocation7 + $0xd0] sm:$0xff]
    %v580 = vld [vmem:[#allocation7 + $0xd8] sm:$0xff]
    %v581 = vld [vmem:[#allocation7 + $0xe0] sm:$0xff]
    %v582 = vld [vmem:[#allocation7 + $0xe8] sm:$0xff]
    %v583 = vld [vmem:[#allocation7 + $0xf0] sm:$0xff]
    %v584 = vld [vmem:[#allocation7 + $0xf8] sm:$0xff]
    %v585 = vld [vmem:[#allocation7 + $0x100] sm:$0xff]
    %v586 = vld [vmem:[#allocation7 + $0x108] sm:$0xff]
    %v587 = vld [vmem:[#allocation7 + $0x110] sm:$0xff]
    %v588 = vld [vmem:[#allocation7 + $0x118] sm:$0xff]
    %v589 = vld [vmem:[#allocation7 + $0x120] sm:$0xff]
    %v590 = vld [vmem:[#allocation7 + $0x128] sm:$0xff]
    %v591 = vld [vmem:[#allocation7 + $0x130] sm:$0xff]
    %v592 = vld [vmem:[#allocation7 + $0x138] sm:$0xff]
    %v593 = vld [vmem:[#allocation7 + $0x140] sm:$0xff]
    %v594 = vld [vmem:[#allocation7 + $0x148] sm:$0xff]
    %v595 = vld [vmem:[#allocation7 + $0x150] sm:$0xff]
    %v596 = vld [vmem:[#allocation7 + $0x158] sm:$0xff]
    %v597 = vld [vmem:[#allocation7 + $0x160] sm:$0xff]
    %v598 = vld [vmem:[#allocation7 + $0x168] sm:$0xff]
    %v599 = vld [vmem:[#allocation7 + $0x170] sm:$0xff]
    %v600 = vld [vmem:[#allocation7 + $0x178] sm:$0xff]
    %601 = vmatpush.msra.mxu0 %v568
    %602 = vmatpush.msra.mxu0 %v567
    %603 = vmatpush.msra.mxu0 %v566
    %604 = vmatpush.msra.mxu0 %v565
    %605 = vmatpush.msra.mxu0 %v564
    %606 = vmatpush.msra.mxu0 %v563
    %607 = vmatpush.msra.mxu0 %v562
    %608 = vmatpush.msra.mxu0 %v561
    %609 = vmatpush.msra.mxu0 %v560
    %610 = vmatpush.msra.mxu0 %v559
    %611 = vmatpush.msra.mxu0 %v558
    %612 = vmatpush.msra.mxu0 %v557
    %613 = vmatpush.msra.mxu0 %v556
    %614 = vmatpush.msra.mxu0 %v555
    %615 = vmatpush.msra.mxu0 %v554
    %616 = vmatpush.msra.mxu0 %v553
    %617 = vmatmul.f32.gmra.mxu0 %v513
    %v618 = vpop.f32.mrf.mxu0
    %v619 = vadd.f32 0.0, %v618
    %620 = vmatmul.f32.gmra.mxu0 %v516
    %v621 = vpop.f32.mrf.mxu0
    %v622 = vadd.f32 0.0, %v621
    %623 = vmatmul.f32.gmra.mxu0 %v519
    %v624 = vpop.f32.mrf.mxu0
    %v625 = vadd.f32 0.0, %v624
    %626 = vmatmul.f32.gmra.mxu0 %v522
    %v627 = vpop.f32.mrf.mxu0
    %v628 = vadd.f32 0.0, %v627
    %629 = vdwg.mxu0
    %630 = vmatpush.msra.mxu0 %v584
    %631 = vmatpush.msra.mxu0 %v583
    %632 = vmatpush.msra.mxu0 %v582
    %633 = vmatpush.msra.mxu0 %v581
    %634 = vmatpush.msra.mxu0 %v580
    %635 = vmatpush.msra.mxu0 %v579
    %636 = vmatpush.msra.mxu0 %v578
    %637 = vmatpush.msra.mxu0 %v577
    %638 = vmatpush.msra.mxu0 %v576
    %639 = vmatpush.msra.mxu0 %v575
    %640 = vmatpush.msra.mxu0 %v574
    %641 = vmatpush.msra.mxu0 %v573
    %642 = vmatpush.msra.mxu0 %v572
    %643 = vmatpush.msra.mxu0 %v571
    %644 = vmatpush.msra.mxu0 %v570
    %645 = vmatpush.msra.mxu0 %v569
    %646 = vmatmul.f32.gmra.mxu0 %v491
    %v647 = vpop.f32.mrf.mxu0
    %v648 = vadd.f32 %v619, %v647
    %649 = vmatmul.f32.gmra.mxu0 %v492
    %v650 = vpop.f32.mrf.mxu0
    %v651 = vadd.f32 %v622, %v650
    %652 = vmatmul.f32.gmra.mxu0 %v493
    %v653 = vpop.f32.mrf.mxu0
    %v654 = vadd.f32 %v625, %v653
    %655 = vmatmul.f32.gmra.mxu0 %v494
    %v656 = vpop.f32.mrf.mxu0
    %v657 = vadd.f32 %v628, %v656
    %658 = vdwg.mxu0
    %659 = vmatpush.msra.mxu0 %v600
    %660 = vmatpush.msra.mxu0 %v599
    %661 = vmatpush.msra.mxu0 %v598
    %662 = vmatpush.msra.mxu0 %v597
    %663 = vmatpush.msra.mxu0 %v596
    %664 = vmatpush.msra.mxu0 %v595
    %665 = vmatpush.msra.mxu0 %v594
    %666 = vmatpush.msra.mxu0 %v593
    %667 = vmatpush.msra.mxu0 %v592
    %668 = vmatpush.msra.mxu0 %v591
    %669 = vmatpush.msra.mxu0 %v590
    %670 = vmatpush.msra.mxu0 %v589
    %671 = vmatpush.msra.mxu0 %v588
    %672 = vmatpush.msra.mxu0 %v587
    %673 = vmatpush.msra.mxu0 %v586
    %674 = vmatpush.msra.mxu0 %v585
    %675 = vmatmul.f32.gmra.mxu0 %v542
    %v676 = vpop.f32.mrf.mxu0
    %v677 = vadd.f32 %v648, %v676
    %678 = vmatmul.f32.gmra.mxu0 %v545
    %v679 = vpop.f32.mrf.mxu0
    %v680 = vadd.f32 %v651, %v679
    %681 = vmatmul.f32.gmra.mxu0 %v548
    %v682 = vpop.f32.mrf.mxu0
    %v683 = vadd.f32 %v654, %v682
    %684 = vmatmul.f32.gmra.mxu0 %v551
    %v685 = vpop.f32.mrf.mxu0
    %v686 = vadd.f32 %v657, %v685
    %687 = vdwg.mxu0
    %v688 = vld [vmem:[%s8] sm:$0x1]
    %v689 = vld [vmem:[%s9] sm:$0x1]
    %690 = vmatpush.msra.mxu0 %v157
    %691 = vmatpush.msra.mxu0 %v156
    %692 = vmatpush.msra.mxu0 %v155
    %693 = vmatpush.msra.mxu0 %v154
    %694 = vmatpush.msra.mxu0 %v153
    %695 = vmatpush.msra.mxu0 %v152
    %696 = vmatpush.msra.mxu0 %v151
    %697 = vmatpush.msra.mxu0 %v150
    %698 = vmatpush.msra.mxu0 %v149
    %699 = vmatpush.msra.mxu0 %v148
    %700 = vmatpush.msra.mxu0 %v147
    %701 = vmatpush.msra.mxu0 %v146
    %702 = vmatpush.msra.mxu0 %v145
    %703 = vmatpush.msra.mxu0 %v144
    %704 = vmatpush.msra.mxu0 %v143
    %705 = vmatpush.msra.mxu0 %v142
    %706 = vmatmul.f32.gmra.mxu0 %v677
    %v707 = vpop.f32.mrf.mxu0
    %v708 = vadd.f32 0.0, %v707
    %709 = vmatmul.f32.gmra.mxu0 %v680
    %v710 = vpop.f32.mrf.mxu0
    %v711 = vadd.f32 0.0, %v710
    %712 = vmatmul.f32.gmra.mxu0 %v683
    %v713 = vpop.f32.mrf.mxu0
    %v714 = vadd.f32 0.0, %v713
    %715 = vmatmul.f32.gmra.mxu0 %v686
    %v716 = vpop.f32.mrf.mxu0
    %v717 = vadd.f32 0.0, %v716
    %718 = vdwg.mxu0
    %v719 = vadd.f32 %v708, %v711
    %v720 = vadd.f32 %v719, %v714
    %v721 = vadd.f32 %v720, %v717
    %v722 = vrot.slane %v721, 4
    %v723 = vadd.f32 %v721, %v722
    %v724 = vrot.slane %v723, 2
    %v725 = vadd.f32 %v723, %v724
    %v726 = vrot.slane %v725, 1
    %v727 = vadd.f32 %v725, %v726
    %v728 = vsub.f32 %v677, %v727
    %v729 = vsub.f32 %v680, %v727
    %v730 = vsub.f32 %v683, %v727
    %v731 = vsub.f32 %v686, %v727
    %v732 = vmul.f32 %v728, %v728
    %v733 = vmul.f32 %v729, %v729
    %v734 = vmul.f32 %v730, %v730
    %v735 = vmul.f32 %v731, %v731
    %736 = vmatpush.msra.mxu0 %v157
    %737 = vmatpush.msra.mxu0 %v156
    %738 = vmatpush.msra.mxu0 %v155
    %739 = vmatpush.msra.mxu0 %v154
    %740 = vmatpush.msra.mxu0 %v153
    %741 = vmatpush.msra.mxu0 %v152
    %742 = vmatpush.msra.mxu0 %v151
    %743 = vmatpush.msra.mxu0 %v150
    %744 = vmatpush.msra.mxu0 %v149
    %745 = vmatpush.msra.mxu0 %v148
    %746 = vmatpush.msra.mxu0 %v147
    %747 = vmatpush.msra.mxu0 %v146
    %748 = vmatpush.msra.mxu0 %v145
    %749 = vmatpush.msra.mxu0 %v144
    %750 = vmatpush.msra.mxu0 %v143
    %751 = vmatpush.msra.mxu0 %v142
    %752 = vmatmul.f32.gmra.mxu0 %v732
    %v753 = vpop.f32.mrf.mxu0
    %v754 = vadd.f32 0.0, %v753
    %755 = vmatmul.f32.gmra.mxu0 %v733
    %v756 = vpop.f32.mrf.mxu0
    %v757 = vadd.f32 0.0, %v756
    %758 = vmatmul.f32.gmra.mxu0 %v734
    %v759 = vpop.f32.mrf.mxu0
    %v760 = vadd.f32 0.0, %v759
    %761 = vmatmul.f32.gmra.mxu0 %v735
    %v762 = vpop.f32.mrf.mxu0
    %v763 = vadd.f32 0.0, %v762
    %764 = vdwg.mxu0
    %v765 = vadd.f32 %v754, %v757
    %v766 = vadd.f32 %v765, %v760
    %v767 = vadd.f32 %v766, %v763
    %v768 = vrot.slane %v767, 4
    %v769 = vadd.f32 %v767, %v768
    %v770 = vrot.slane %v769, 2
    %v771 = vadd.f32 %v769, %v770
    %v772 = vrot.slane %v771, 1
    %v773 = vadd.f32 %v771, %v772
    %v774 = vadd.f32 %v773, 1e-05
    %v775 = vrsqrt.pop %v774
    %v776 = vmul.f32 %v775, %v774
    %v777 = vmul.f32 %v776, %v775
    %v778 = vmul.f32 0.5, %v777
    %v779 = vsub.f32 1.5, %v778
    %v780 = vmul.f32 %v775, %v779
    %vm781 = vweird.f32 %v774
    %vm782 = vweird.f32 %v775
    %vm783 = vmor %vm781, %vm782
    %v784 = vsel %vm783, %v775, %v780
    %v785 = vmul.f32 %v728, %v784
    %v786 = vmul.f32 %v729, %v784
    %v787 = vmul.f32 %v730, %v784
    %v788 = vmul.f32 %v731, %v784
    %v790 = vperm.slane %v688, 0
    %v792 = vmul.f32 %v785, %v790
    %v793 = vmul.f32 %v786, %v790
    %v794 = vmul.f32 %v787, %v790
    %v795 = vmul.f32 %v788, %v790
    %v797 = vperm.slane %v689, 0
    %v799 = vadd.f32 %v792, %v797
    %v800 = vadd.f32 %v793, %v797
    %v801 = vadd.f32 %v794, %v797
    %v802 = vadd.f32 %v795, %v797
    %v803 = vadd.f32 %v799, %v130
    %v804 = vadd.f32 %v800, %v131
    %v805 = vadd.f32 %v801, %v132
    %v806 = vadd.f32 %v802, %v133
    %v807 = vmax.f32 %v803, 0.0
    %v808 = vmax.f32 %v804, 0.0
    %v809 = vmax.f32 %v805, 0.0
    %v810 = vmax.f32 %v806, 0.0
    %811 = vst [vmem:[#allocation13] sm:$0xff] %v807
    %812 = vst [vmem:[#allocation13 + $0x8] sm:$0xff] %v808
    %813 = vst [vmem:[#allocation13 + $0x10] sm:$0xff] %v809
    %814 = vst [vmem:[#allocation13 + $0x18] sm:$0xff] %v810
    // Predicated region
    $region66: #{tpu_custom_call.1} parent=1 // pred_check
      _
    $region67: #{tpu_custom_call.1} parent=1 // pred_check_branch
      %816 = sbr.rel (0) target = $region69
    $region68: #{tpu_custom_call.1} parent=1 // pred_region
      %818 = vsyncadd [#allocation4], 0
      %s819 = sshll.u32 [#allocation13], 4
      %s820 = int_to_ptr.vmem [resolvable:$true] %s819
      %s821 = sshll.u32 %s10, 4
      %s822 = int_to_ptr.hbm [resolvable:$true] %s821
      %827 = dma.vmem_to_hbm [thread:$0]  %s820, 512, %s822, [#allocation4], 128, 128, 8
    $region69: #{tpu_custom_call.1} parent=1 // pred_fallthru
      _
    // Predicated region
    $region70: #{tpu_custom_call.1} parent=1 // pred_check
      _
    $region71: #{tpu_custom_call.1} parent=1 // pred_check_branch
      %829 = sbr.rel (0) target = $region73
    $region72: #{tpu_custom_call.1} parent=1 // pred_region
      %831 = dma.done [#allocation4], 512
    $region73: #{tpu_custom_call.1} parent=1 // pred_fallthru
      _
    %832 = vsyncpa [#allocation3], 1
    %833 = vsyncpa [#allocation6], 1
    %834 = vsyncpa [#allocation9], 1
    %835 = vsyncpa [#allocation12], 1
    %836 = vsyncpa [#allocation4], 1

</llo_original>
